<compile_context>
chip_gen: v5e
topology: v5e:2x2
jax: 0.10.0
libtpu: 0.0.40
codegen_flags: <defaults>
</compile_context>

<pallas_src>
import functools
import numpy as np

import jax
import jax.numpy as jnp
from jax import lax
from jax.experimental import pallas as pl
from jax.experimental.pallas import tpu as pltpu


def _round_up(x, m):
    return (x + m - 1) // m * m


# --------------------------- tiled linear (MXU) ----------------------------
# x, w arrive in bf16 (cast once in the wrapper); accumulate f32 directly into
# the resident output block (k axis last, "arbitrary").

def _linear_kernel(x_ref, w_ref, b_ref, o_ref, *, relu):
    k = pl.program_id(2)

    @pl.when(k == 0)
    def _():
        o_ref[...] = jnp.zeros_like(o_ref)

    o_ref[...] += jnp.dot(x_ref[...], w_ref[...],
                          preferred_element_type=jnp.float32)

    @pl.when(k == pl.num_programs(2) - 1)
    def _():
        res = o_ref[...] + b_ref[...]
        if relu:
            res = jnp.maximum(res, 0.0)
        o_ref[...] = res


def linear(x, w, b, *, relu=False, tm=256, tn=256, tk=512):
    """y = x @ w + b (optional ReLU). Pads M->8k, N/K->128k, tiles, slices back.

    tn defaults to 256 so a realistically sized N yields >=2 "parallel" tiles
    (v7x megacore); at the tiny shapes in __main__ the grid collapses to
    1x1x1, which is fine.
    """
    x = x.astype(jnp.bfloat16)
    w = w.astype(jnp.bfloat16)
    M, K = x.shape
    K2, N = w.shape
    assert K == K2 and b.shape == (1, N)

    Mp, Kp, Np = _round_up(M, 8), _round_up(K, 128), _round_up(N, 128)
    tm, tk, tn = min(tm, Mp), min(tk, Kp), min(tn, Np)
    Mp, Kp, Np = _round_up(Mp, tm), _round_up(Kp, tk), _round_up(Np, tn)

    xp = jnp.pad(x, ((0, Mp - M), (0, Kp - K))) if (Mp, Kp) != (M, K) else x
    wp = jnp.pad(w, ((0, Kp - K), (0, Np - N))) if (Kp, Np) != (K, N) else w
    bp = jnp.pad(b, ((0, 0), (0, Np - N))) if Np != N else b

    grid = (Mp // tm, Np // tn, Kp // tk)
    out = pl.pallas_call(
        functools.partial(_linear_kernel, relu=relu),
        out_shape=jax.ShapeDtypeStruct((Mp, Np), jnp.float32),
        grid=grid,
        in_specs=[pl.BlockSpec((tm, tk), lambda i, j, k: (i, k)),
                  pl.BlockSpec((tk, tn), lambda i, j, k: (k, j)),
                  pl.BlockSpec((1, tn), lambda i, j, k: (0, j))],
        out_specs=pl.BlockSpec((tm, tn), lambda i, j, k: (i, j)),
        compiler_params=pltpu.CompilerParams(
            dimension_semantics=("parallel", "parallel", "arbitrary")),
    )(xp, wp, bp)
    return out[:M, :N] if (Mp, Np) != (M, N) else out


# --------------- fused CNN head: conv3x3+ReLU -> avgpool -> fc --------------
# Tiled over (image, HW-chunk): per grid step one (thw, C*9) patch chunk is
# matmul'd with the conv weights, reduced over rows into a pooling scratch,
# and on the last chunk the pooled vector goes through the fc matmul.

def _cnn_head_kernel(patch_ref, cw_ref, cb_ref, fw_ref, fb_ref, o_ref,
                     pool_ref, *, inv_hw):
    h = pl.program_id(1)

    @pl.when(h == 0)
    def _():
        pool_ref[...] = jnp.zeros_like(pool_ref)

    conv = jnp.dot(patch_ref[...], cw_ref[...],
                   preferred_element_type=jnp.float32) + cb_ref[...]
    conv = jnp.maximum(conv, 0.0)                                # (thw, Cmp)
    pool_ref[...] += jnp.sum(conv, axis=0, keepdims=True)        # XLU reduce

    @pl.when(h == pl.num_programs(1) - 1)
    def _():
        pooled = (pool_ref[...] * inv_hw).astype(jnp.bfloat16)   # (1, Cmp)
        feats = jnp.dot(pooled, fw_ref[...],
                        preferred_element_type=jnp.float32) + fb_ref[...]
        o_ref[...] = feats.reshape(o_ref.shape).astype(o_ref.dtype)


def im2col_3x3_same(x):
    """x:(N,C,H,W) NCHW -> (N*H*W, C*9); ordering matches weight.reshape(Cout, Cin*9)."""
    N, C, H, W = x.shape
    xp = jnp.pad(x, ((0, 0), (0, 0), (1, 1), (1, 1)))
    cols = []
    for di in range(3):
        for dj in range(3):
            cols.append(xp[:, :, di:di + H, dj:dj + W])
    p = jnp.stack(cols, axis=2)        # (N, C, 9, H, W)
    p = p.transpose(0, 3, 4, 1, 2)     # (N, H, W, C, 9)
    return p.reshape(N * H * W, C * 9)


def cnn_head(imgs, conv_w, conv_b, fc_w, fc_b):
    """conv3x3 SAME + ReLU -> global avg pool -> fc, fused into one pallas_call.

    Returns (B, Ep) bf16 image features (E zero-padded to a 128 multiple).
    """
    # TODO(synk): for large images, generate the im2col patches per-tile inside
    # the kernel (9 shifted matmuls) instead of materializing the 9x-expanded
    # patch tensor in HBM via XLA.
    B, C, Hh, Ww = imgs.shape
    HW = Hh * Ww
    assert HW % 8 == 0
    patches = im2col_3x3_same(imgs).astype(jnp.bfloat16)         # (B*HW, C*9)
    Kc = patches.shape[1]
    Cmid, E = fc_w.shape
    Kcp, Cmp, Ep = _round_up(Kc, 128), _round_up(Cmid, 128), _round_up(E, 128)

    patches = jnp.pad(patches, ((0, 0), (0, Kcp - Kc)))
    cw = jnp.pad(conv_w.astype(jnp.bfloat16), ((0, Kcp - Kc), (0, Cmp - Cmid)))
    cb = jnp.pad(conv_b, ((0, 0), (0, Cmp - Cmid)))
    fw = jnp.pad(fc_w.astype(jnp.bfloat16), ((0, Cmp - Cmid), (0, Ep - E)))
    fb = jnp.pad(fc_b, ((0, 0), (0, Ep - E)))

    # HW-chunk of at most 1024 rows keeps the patch tile well under the scoped
    # VMEM limit on every generation (incl. v7x's 64 MiB).
    thw = HW
    for cand in (1024, 512, 256, 128, 64, 32, 16, 8):
        if HW >= cand and HW % cand == 0:
            thw = cand
            break
    n_hw = HW // thw

    out = pl.pallas_call(
        functools.partial(_cnn_head_kernel, inv_hw=1.0 / HW),
        out_shape=jax.ShapeDtypeStruct((B, 1, Ep), jnp.bfloat16),
        grid=(B, n_hw),
        in_specs=[pl.BlockSpec((thw, Kcp), lambda b, h: (b * n_hw + h, 0)),
                  pl.BlockSpec((Kcp, Cmp), lambda b, h: (0, 0)),
                  pl.BlockSpec((1, Cmp), lambda b, h: (0, 0)),
                  pl.BlockSpec((Cmp, Ep), lambda b, h: (0, 0)),
                  pl.BlockSpec((1, Ep), lambda b, h: (0, 0))],
        out_specs=pl.BlockSpec((1, 1, Ep), lambda b, h: (b, 0, 0)),
        scratch_shapes=[pltpu.VMEM((1, Cmp), jnp.float32)],
        compiler_params=pltpu.CompilerParams(
            dimension_semantics=("parallel", "arbitrary")),
    )(patches, cw, cb, fw, fb)
    return out.reshape(B, Ep)


# ------ fused embedding gather + [img_feat; emb] concat + layer-0 proj ------
# Grid over timesteps; per step the token ids are turned into a one-hot via an
# iota compare (table stays resident in VMEM, gather goes through the MXU),
# t==0 selects the image features instead, then xg0[t] = x @ Wih0 + b0.

def _embed_xg0_kernel(ids_ref, img_ref, tab_ref, w_ref, b_ref, o_ref):
    t = pl.program_id(0)
    Bp = ids_ref.shape[1]
    Vp = tab_ref.shape[0]
    ids = ids_ref[...].reshape(Bp, 1)                            # int32 (Bp,1)
    onehot = (ids == lax.broadcasted_iota(jnp.int32, (Bp, Vp), 1)
              ).astype(jnp.bfloat16)                             # (Bp, Vp)
    gathered = jnp.dot(onehot, tab_ref[...],
                       preferred_element_type=jnp.float32).astype(jnp.bfloat16)
    x = jnp.where(t == 0, img_ref[...], gathered)                # (Bp, Ep) bf16
    xg = jnp.dot(x, w_ref[...],
                 preferred_element_type=jnp.float32) + b_ref[...]
    o_ref[...] = xg.reshape(o_ref.shape)


def embed_xg0(ids3d, img_feats, table, wih0, b0):
    Ttot, Bp, _ = ids3d.shape
    Vp, Ep = table.shape
    H4 = wih0.shape[1]
    return pl.pallas_call(
        _embed_xg0_kernel,
        out_shape=jax.ShapeDtypeStruct((Ttot, Bp, H4), jnp.float32),
        grid=(Ttot,),
        in_specs=[pl.BlockSpec((1, Bp, 1), lambda t: (t, 0, 0)),
                  pl.BlockSpec((Bp, Ep), lambda t: (0, 0)),
                  pl.BlockSpec((Vp, Ep), lambda t: (0, 0)),
                  pl.BlockSpec((Ep, H4), lambda t: (0, 0)),
                  pl.BlockSpec((1, H4), lambda t: (0, 0))],
        out_specs=pl.BlockSpec((1, Bp, H4), lambda t: (t, 0, 0)),
        compiler_params=pltpu.CompilerParams(
            dimension_semantics=("parallel",)),
    )(ids3d, img_feats, table, wih0, b0)


# ----------------------- 2-layer LSTM (packed-seq mask) ---------------------
# Layer-0 input projection precomputed (xg0); per step only
#   g0 = xg0[t] + h0 @ Whh0           (1 matmul)
#   g1 = [h0, h1] @ [Wih1; Whh1] + b1 (1 fused matmul)
# Weight refs are read inside the step (short live ranges); finished sequences
# are frozen with keep = t < len (PyTorch pack_padded_sequence semantics).

def _lstm2_kernel(xg0_ref, lens_ref, whh0_ref, w1_ref, b1_ref,
                  y_ref, hn_ref, cn_ref, *, T, H, Bp):

    def gates_to_hc(g, c_prev):
        # PyTorch gate order: i, f, g, o ; gate math in f32 (VPU/EUP)
        i_g = jax.nn.sigmoid(g[:, 0 * H:1 * H])
        f_g = jax.nn.sigmoid(g[:, 1 * H:2 * H])
        g_g = jnp.tanh(g[:, 2 * H:3 * H])
        o_g = jax.nn.sigmoid(g[:, 3 * H:4 * H])
        c_new = f_g * c_prev + i_g * g_g
        h_new = o_g * jnp.tanh(c_new)
        return h_new, c_new

    lens = lens_ref[...]                                         # (Bp, 1) int32

    def step(t, carry):
        h0, c0, h1, c1 = carry
        keep = t < lens                                          # (Bp, 1) bool
        # layer 0
        g0 = xg0_ref[t] + jnp.dot(h0.astype(jnp.bfloat16), whh0_ref[...],
                                  preferred_element_type=jnp.float32)
        h0n, c0n = gates_to_hc(g0, c0)
        h0 = jnp.where(keep, h0n, h0)
        c0 = jnp.where(keep, c0n, c0)
        # layer 1: single fused matmul
        hcat = jnp.concatenate([h0, h1], axis=1).astype(jnp.bfloat16)
        g1 = (jnp.dot(hcat, w1_ref[...], preferred_element_type=jnp.float32)
              + b1_ref[...])
        h1n, c1n = gates_to_hc(g1, c1)
        h1 = jnp.where(keep, h1n, h1)
        c1 = jnp.where(keep, c1n, c1)
        y_ref[t] = h1.astype(y_ref.dtype)
        return (h0, c0, h1, c1)

    z = jnp.zeros((Bp, H), jnp.float32)
    h0, c0, h1, c1 = lax.fori_loop(0, T, step, (z, z, z, z), unroll=True)
    hn_ref[0] = h0
    hn_ref[1] = h1
    cn_ref[0] = c0
    cn_ref[1] = c1


def lstm2(xg0, lens, whh0, w1, b1):
    """xg0:(T,Bp,4H) f32 precomputed layer-0 gates; lens:(Bp,1) int32."""
    Ttot, Bp, H4 = xg0.shape
    H = H4 // 4
    y, hn, cn = pl.pallas_call(
        functools.partial(_lstm2_kernel, T=Ttot, H=H, Bp=Bp),
        out_shape=(jax.ShapeDtypeStruct((Ttot, Bp, H), jnp.bfloat16),
                   jax.ShapeDtypeStruct((2, Bp, H), jnp.float32),
                   jax.ShapeDtypeStruct((2, Bp, H), jnp.float32)),
        grid=(1,),
        in_specs=[pl.BlockSpec((Ttot, Bp, H4), lambda i: (0, 0, 0)),
                  pl.BlockSpec((Bp, 1), lambda i: (0, 0)),
                  pl.BlockSpec((H, H4), lambda i: (0, 0)),
                  pl.BlockSpec((2 * H, H4), lambda i: (0, 0)),
                  pl.BlockSpec((1, H4), lambda i: (0, 0))],
        out_specs=(pl.BlockSpec((Ttot, Bp, H), lambda i: (0, 0, 0)),
                   pl.BlockSpec((2, Bp, H), lambda i: (0, 0, 0)),
                   pl.BlockSpec((2, Bp, H), lambda i: (0, 0, 0))),
        compiler_params=pltpu.CompilerParams(
            dimension_semantics=("arbitrary",)),   # serial recurrence
    )(xg0, lens, whh0, w1, b1)
    return y, hn, cn


# ------------------------------ params / model ------------------------------

def init_params(key, *, vocab_size, embedding_size, rnn_size,
                in_channels=3, conv_channels=8, ksize=3):
    ks = jax.random.split(key, 12)

    def u(k, shape, scale=0.1):
        return jax.random.uniform(k, shape, jnp.float32, -scale, scale)

    E, H = embedding_size, rnn_size
    return dict(
        # synthetic cnn backbone + cnn.fc = Linear(in_features, embedding_size)
        conv_w=u(ks[0], (in_channels * ksize * ksize, conv_channels)),
        conv_b=u(ks[1], (1, conv_channels)),
        fc_w=u(ks[2], (conv_channels, E)),
        fc_b=u(ks[3], (1, E)),
        # nn.Embedding(len(vocab), embedding_size)
        embed=u(ks[4], (vocab_size, E)),
        # nn.LSTM(E, H, num_layers=2): weights pre-transposed to (in, 4H),
        # biases b_ih + b_hh combined to (1, 4H)
        wih0=u(ks[5], (E, 4 * H)),
        whh0=u(ks[6], (H, 4 * H)),
        b0=u(ks[7], (1, 4 * H)),
        wih1=u(ks[8], (H, 4 * H)),
        whh1=u(ks[9], (H, 4 * H)),
        b1=u(ks[10], (1, 4 * H)),
        # nn.Linear(rnn_size, len(vocab))
        cls_w=u(ks[11], (H, vocab_size)),
        cls_b=jnp.zeros((1, vocab_size), jnp.float32),
    )


def caption_model_forward(params, imgs, captions, lengths):
    """
    imgs:     (B, 3, H, W) float32 NCHW
    captions: (T, B) int32, time-major
    lengths:  host list/np array for the concatenated [img_feat; caption]
              sequence, sorted descending (pack_padded_sequence contract).
    Returns (pred, (h_n, c_n)) with pred:(sum(lengths), vocab),
            h_n/c_n:(2, B, rnn_size).
    """
    # TODO(synk): lengths are consumed at trace time (packed-output shape and
    # prefix counts are static per lengths), mirroring pack_padded_sequence's
    # host-side metadata; a new lengths pattern recompiles.
    lengths = np.asarray(lengths)
    B, C, Hi, Wi = imgs.shape
    T, B2 = captions.shape
    assert B == B2
    V, E = params["embed"].shape
    H = params["whh0"].shape[0]
    Bp = _round_up(max(B, 8), 8)        # sublane-pad batch
    Ttot = T + 1
    assert int(lengths.max()) <= Ttot and np.all(np.diff(lengths) <= 0)

    Ep = _round_up(E, 128)
    Vp = _round_up(V, 128)

    # Weights cast to bf16 once (f32 accumulation stays inside the kernels).
    tab = jnp.pad(params["embed"].astype(jnp.bfloat16),
                  ((0, Vp - V), (0, Ep - E)))
    wih0 = jnp.pad(params["wih0"].astype(jnp.bfloat16), ((0, Ep - E), (0, 0)))
    whh0 = params["whh0"].astype(jnp.bfloat16)
    w1 = jnp.concatenate([params["wih1"], params["whh1"]],
                         axis=0).astype(jnp.bfloat16)            # (2H, 4H)

    # cnn(imgs): fused conv+ReLU -> global avg pool -> fc (one kernel).
    img_feats = cnn_head(imgs, params["conv_w"], params["conv_b"],
                         params["fc_w"], params["fc_b"])         # (B, Ep) bf16
    img_feats = jnp.pad(img_feats, ((0, Bp - B), (0, 0)))        # (Bp, Ep)

    # embedder(captions) + cat([img_feats, emb], 0) + hoisted layer-0 input
    # projection, all fused: xg0[t] = x_t @ Wih0 + b0, x_0 = img_feats.
    caps = jnp.pad(captions.astype(jnp.int32), ((0, 0), (0, Bp - B)))
    ids3d = jnp.concatenate([jnp.zeros((1, Bp), jnp.int32), caps],
                            axis=0)[..., None]                   # (Ttot, Bp, 1)
    xg0 = embed_xg0(ids3d, img_feats, tab, wih0, params["b0"])   # (Ttot,Bp,4H)

    # 2-layer LSTM with in-kernel freeze mask derived from lengths.
    lens_p = np.zeros((Bp, 1), np.int32)
    lens_p[:B, 0] = lengths
    y, h_n, c_n = lstm2(xg0, jnp.asarray(lens_p), whh0, w1, params["b1"])

    # PackedSequence.data order = per-timestep contiguous batch prefixes
    # (lengths sorted descending) -> Ttot static slices, no per-row gather.
    counts = [int(np.sum(lengths > t)) for t in range(Ttot)]
    feats_packed = jnp.concatenate(
        [y[t, :c, :] for t, c in enumerate(counts) if c > 0], axis=0)

    # classifier(feats[0]): tiled, vocab lane-padded to 128 internally.
    pred = linear(feats_packed, params["cls_w"], params["cls_b"])

    return pred, (h_n[:, :B, :], c_n[:, :B, :])


# ---------------------------------- main ------------------------------------

if __name__ == "__main__":
    B, Cin, Hi, Wi = 2, 3, 16, 16
    T = 8          # caption length (time-major)
    V = 40         # len(vocab)
    E = 128        # embedding_size
    H = 128        # rnn_size

    key = jax.random.PRNGKey(0)
    kp, ki, kc = jax.random.split(key, 3)
    params = init_params(kp, vocab_size=V, embedding_size=E, rnn_size=H)

    imgs = jax.random.normal(ki, (B, Cin, Hi, Wi), jnp.float32)
    captions = jax.random.randint(kc, (T, B), 0, V, dtype=jnp.int32)
    lengths = [T + 1, T - 1]   # sorted descending, <= T+1 (img token + caption)

    pred, (h_n, c_n) = caption_model_forward(params, imgs, captions, lengths)
    jax.block_until_ready((pred, h_n, c_n))

    assert pred.shape == (sum(lengths), V)
    assert h_n.shape == (2, B, H) and c_n.shape == (2, B, H)
    print("KERNEL_OK")
</pallas_src>

<mosaic_0001>
module attributes {stable_mosaic.version = 11 : i64} {
  func.func @_cnn_head_kernel(%arg0: i32, %arg1: i32, %arg2: memref<256x128xbf16, #tpu.memory_space<vmem>>, %arg3: memref<128x128xbf16, #tpu.memory_space<vmem>>, %arg4: memref<1x128xf32, #tpu.memory_space<vmem>>, %arg5: memref<128x128xbf16, #tpu.memory_space<vmem>>, %arg6: memref<1x128xf32, #tpu.memory_space<vmem>>, %arg7: memref<1x1x128xbf16, #tpu.memory_space<vmem>>, %arg8: memref<1x128xf32, #tpu.memory_space<vmem>>) attributes {dimension_semantics = [#tpu.dimension_semantics<parallel>, #tpu.dimension_semantics<arbitrary>], iteration_bounds = array<i64: 2, 1>, scalar_prefetch = 0 : i64, scratch_operands = 1 : i64, tpu.core_type = #tpu.core_type<tc>, window_params = [{transform_indices = @transform_0, window_bounds = array<i64: 256, 128>}, {pipeline_mode = #tpu.pipeline_mode<synchronous>, transform_indices = @transform_1, window_bounds = array<i64: 128, 128>}, {pipeline_mode = #tpu.pipeline_mode<synchronous>, transform_indices = @transform_2, window_bounds = array<i64: 1, 128>}, {pipeline_mode = #tpu.pipeline_mode<synchronous>, transform_indices = @transform_3, window_bounds = array<i64: 128, 128>}, {pipeline_mode = #tpu.pipeline_mode<synchronous>, transform_indices = @transform_4, window_bounds = array<i64: 1, 128>}, {transform_indices = @transform_5, window_bounds = array<i64: 1, 1, 128>}]} {
    %c0_i32 = arith.constant 0 : i32
    %0 = arith.cmpi eq, %arg1, %c0_i32 : i32
    %1 = arith.extui %0 : i1 to i32
    %c0_i32_0 = arith.constant 0 : i32
    %2 = arith.cmpi ne, %1, %c0_i32_0 : i32
    scf.if %2 {
      %cst_14 = arith.constant 0.000000e+00 : f32
      %19 = vector.broadcast %cst_14 : f32 to vector<1x128xf32>
      %c0_15 = arith.constant 0 : index
      %c0_16 = arith.constant 0 : index
      %20 = vector.load %arg8[%c0_15, %c0_16] : memref<1x128xf32, #tpu.memory_space<vmem>>, vector<1x128xf32>
      tpu.vector_store %arg8[%c0_15, %c0_16], %19 {strides = array<i32>} : memref<1x128xf32, #tpu.memory_space<vmem>>, vector<1x128xf32>,
    } else {
    }
    %c0 = arith.constant 0 : index
    %c0_1 = arith.constant 0 : index
    %3 = vector.load %arg2[%c0, %c0_1] : memref<256x128xbf16, #tpu.memory_space<vmem>>, vector<256x128xbf16>
    %c0_2 = arith.constant 0 : index
    %c0_3 = arith.constant 0 : index
    %4 = vector.load %arg3[%c0_2, %c0_3] : memref<128x128xbf16, #tpu.memory_space<vmem>>, vector<128x128xbf16>
    %cst = arith.constant dense<0.000000e+00> : vector<256x128xf32>
    %5 = tpu.matmul %3, %4, %cst {dimension_numbers = #tpu.dot_dimension_numbers<[1], [0], [0], [1], [0, 0, 1, 1], [], []>} : vector<256x128xbf16>, vector<128x128xbf16>, vector<256x128xf32> -> vector<256x128xf32>
    %c0_4 = arith.constant 0 : index
    %c0_5 = arith.constant 0 : index
    %6 = vector.load %arg4[%c0_4, %c0_5] : memref<1x128xf32, #tpu.memory_space<vmem>>, vector<1x128xf32>
    %7 = vector.broadcast %6 : vector<1x128xf32> to vector<256x128xf32>
    %8 = arith.addf %5, %7 : vector<256x128xf32>
    %cst_6 = arith.constant 0.000000e+00 : f32
    %9 = vector.broadcast %cst_6 : f32 to vector<256x128xf32>
    %10 = arith.maximumf %8, %9 : vector<256x128xf32>
    %c0_7 = arith.constant 0 : index
    %c0_8 = arith.constant 0 : index
    %11 = vector.load %arg8[%c0_7, %c0_8] : memref<1x128xf32, #tpu.memory_space<vmem>>, vector<1x128xf32>
    %cst_9 = arith.constant dense<0.000000e+00> : vector<128xf32>
    %12 = vector.multi_reduction <add>, %10, %cst_9 [0] : vector<256x128xf32> to vector<128xf32>
    %13 = vector.shape_cast %12 : vector<128xf32> to vector<1x128xf32>
    %14 = arith.addf %11, %13 : vector<1x128xf32>
    %c0_10 = arith.constant 0 : index
    %c0_11 = arith.constant 0 : index
    %15 = vector.load %arg8[%c0_10, %c0_11] : memref<1x128xf32, #tpu.memory_space<vmem>>, vector<1x128xf32>
    tpu.vector_store %arg8[%c0_10, %c0_11], %14 {strides = array<i32>} : memref<1x128xf32, #tpu.memory_space<vmem>>, vector<1x128xf32>,
    %c0_i32_12 = arith.constant 0 : i32
    %16 = arith.cmpi eq, %arg1, %c0_i32_12 : i32
    %17 = arith.extui %16 : i1 to i32
    %c0_i32_13 = arith.constant 0 : i32
    %18 = arith.cmpi ne, %17, %c0_i32_13 : i32
    scf.if %18 {
      %c0_14 = arith.constant 0 : index
      %c0_15 = arith.constant 0 : index
      %19 = vector.load %arg8[%c0_14, %c0_15] : memref<1x128xf32, #tpu.memory_space<vmem>>, vector<1x128xf32>
      %cst_16 = arith.constant 3.906250e-03 : f32
      %20 = vector.broadcast %cst_16 : f32 to vector<1x128xf32>
      %21 = arith.mulf %19, %20 : vector<1x128xf32>
      %22 = arith.truncf %21 : vector<1x128xf32> to vector<1x128xbf16>
      %c0_17 = arith.constant 0 : index
      %c0_18 = arith.constant 0 : index
      %23 = vector.load %arg5[%c0_17, %c0_18] : memref<128x128xbf16, #tpu.memory_space<vmem>>, vector<128x128xbf16>
      %cst_19 = arith.constant dense<0.000000e+00> : vector<1x128xf32>
      %24 = tpu.matmul %22, %23, %cst_19 {dimension_numbers = #tpu.dot_dimension_numbers<[1], [0], [0], [1], [0, 0, 1, 1], [], []>} : vector<1x128xbf16>, vector<128x128xbf16>, vector<1x128xf32> -> vector<1x128xf32>
      %c0_20 = arith.constant 0 : index
      %c0_21 = arith.constant 0 : index
      %25 = vector.load %arg6[%c0_20, %c0_21] : memref<1x128xf32, #tpu.memory_space<vmem>>, vector<1x128xf32>
      %26 = arith.addf %24, %25 : vector<1x128xf32>
      %27 = vector.shape_cast %26 : vector<1x128xf32> to vector<1x1x128xf32>
      %28 = arith.truncf %27 : vector<1x1x128xf32> to vector<1x1x128xbf16>
      %c0_22 = arith.constant 0 : index
      %c0_23 = arith.constant 0 : index
      %c0_24 = arith.constant 0 : index
      %29 = vector.load %arg7[%c0_22, %c0_23, %c0_24] : memref<1x1x128xbf16, #tpu.memory_space<vmem>>, vector<1x1x128xbf16>
      tpu.vector_store %arg7[%c0_22, %c0_23, %c0_24], %28 {strides = array<i32>} : memref<1x1x128xbf16, #tpu.memory_space<vmem>>, vector<1x1x128xbf16>,
    } else {
    }
    return
  }
  func.func @transform_0(%arg0: i32, %arg1: i32) -> (i32, i32) {
    %c1_i32 = arith.constant 1 : i32
    %0 = arith.muli %arg0, %c1_i32 : i32
    %1 = arith.addi %0, %arg1 : i32
    %c0_i32 = arith.constant 0 : i32
    %c0_i32_0 = arith.constant 0 : i32
    return %1, %c0_i32 : i32, i32
  }
  func.func @transform_1(%arg0: i32, %arg1: i32) -> (i32, i32) {
    %c0_i32 = arith.constant 0 : i32
    %c0_i32_0 = arith.constant 0 : i32
    %c0_i32_1 = arith.constant 0 : i32
    return %c0_i32, %c0_i32_0 : i32, i32
  }
  func.func @transform_2(%arg0: i32, %arg1: i32) -> (i32, i32) {
    %c0_i32 = arith.constant 0 : i32
    %c0_i32_0 = arith.constant 0 : i32
    %c0_i32_1 = arith.constant 0 : i32
    return %c0_i32, %c0_i32_0 : i32, i32
  }
  func.func @transform_3(%arg0: i32, %arg1: i32) -> (i32, i32) {
    %c0_i32 = arith.constant 0 : i32
    %c0_i32_0 = arith.constant 0 : i32
    %c0_i32_1 = arith.constant 0 : i32
    return %c0_i32, %c0_i32_0 : i32, i32
  }
  func.func @transform_4(%arg0: i32, %arg1: i32) -> (i32, i32) {
    %c0_i32 = arith.constant 0 : i32
    %c0_i32_0 = arith.constant 0 : i32
    %c0_i32_1 = arith.constant 0 : i32
    return %c0_i32, %c0_i32_0 : i32, i32
  }
  func.func @transform_5(%arg0: i32, %arg1: i32) -> (i32, i32, i32) {
    %c0_i32 = arith.constant 0 : i32
    %c0_i32_0 = arith.constant 0 : i32
    %c0_i32_1 = arith.constant 0 : i32
    return %arg0, %c0_i32, %c0_i32_0 : i32, i32, i32
  }
}

</mosaic_0001>

<llo_original>
// kernel: tpu_custom_call.1
$region0: #{tpu_custom_call.1}
  #allocation0 [shape = 'u32[]', space=smem, size = 0x4, offset = 0x4, fixed_abs, tag = 'smem constant byte address 0x4 - core index']
  #allocation1 [shape = 'u32[72,128]{1,0:T(1,128)}', space=vmem, size = 0x9000, scoped, tag = 'internal scratch']
  #allocation2 [shape = 'f32[1,128]{1,0:T(1,128)}', space=vmem, size = 0x200, scoped, tag = 'scratch operand']
  %s0 = inlined_call_operand.hbm [shape: bf16[512,128], index: 0, kind: input, shape index: {}]
  %s1 = inlined_call_operand.hbm [shape: bf16[128,128], index: 1, kind: input, shape index: {}]
  %s2 = inlined_call_operand.vmem [shape: f32[1,128], index: 2, kind: input, shape index: {}]
  %s3 = inlined_call_operand.hbm [shape: bf16[128,128], index: 3, kind: input, shape index: {}]
  %s4 = inlined_call_operand.vmem [shape: f32[1,128], index: 4, kind: input, shape index: {}]
  %s5 = inlined_call_operand.vmem [shape: bf16[2,1,128], index: 5, kind: output, shape index: {}]
  %s6 = sld [smem:[#allocation0]]
  $region73: #{tpu_custom_call.1} parent=0
    _
  %s8 = ssub.s32 1, %s6
  %s9 = scalar_select 0, %s8, %s6
  $region1: #{tpu_custom_call.1} parent=0
    #allocation3 [shape = 'u8[131072]{0}', space=vmem, size = 0x20000, scoped, tag = 'input window, operand 0']
    #allocation4 [shape = 's32[2]{0}', space=sflag, size = 0x8, scoped, tag = 'scoped memory for tpu_custom_call.1']
    #allocation5 [shape = 'u8[32768]{0}', space=vmem, size = 0x8000, scoped, tag = 'input window, operand 1, single buffered']
    #allocation6 [shape = 's32[1]{0}', space=sflag, size = 0x4, scoped, tag = 'scoped memory for tpu_custom_call.1']
    #allocation7 [shape = 'u8[32768]{0}', space=vmem, size = 0x8000, scoped, tag = 'input window, operand 3, single buffered']
    %10 = vsyncpa [#allocation4], 0
    %s11 = scalar_lea.sflag [#allocation4], 1
    %12 = vsyncpa %s11, 0
    %13 = vsyncpa [#allocation6], 0
    loop: start=0, step=1, limit=4
    $region2: #{tpu_custom_call.1} parent=1 // loop_pre_header
      _
    $region3: #{tpu_custom_call.1} parent=1 // loop_header
      %s15 = sphi 0, %s19
      %p16 = scmp.ge.s32.totalorder %s15, 4
      %s22 = sphi 0, %s34
      %s23 = sphi 0, %s30
      %s24 = sphi 0, %s22
      %s25 = sphi 0, %s23
      %s26 = sphi 0, %s24
      %s27 = sphi 0, %s25
      %s39 = sphi 0, %s41
      %s42 = sphi 0, %s39
      %s43 = sphi 0, %s42
      %s59 = sphi 0, %s43
      %s63 = sphi 0, %s63
      %s65 = sphi 0, %s63
      %s66 = sphi 0, %s65
      %s80 = sphi 0, %s66
      %s84 = sphi 0, %s84
      %s86 = sphi 0, %s84
      %s87 = sphi 0, %s86
      %s101 = sphi 0, %s87
      %s105 = sphi 0, %s105
      %s107 = sphi 0, %s105
      %s108 = sphi 0, %s107
      %s122 = sphi 0, %s108
      %s126 = sphi 0, %s126
      %s128 = sphi 0, %s126
      %s129 = sphi 0, %s128
      %s143 = sphi 0, %s129
      %s149 = sphi 0, %s151
      %s152 = sphi 0, %s149
      %s153 = sphi 0, %s152
      %s169 = sphi 0, %s153
    $region4: #{tpu_custom_call.1} parent=1 // loop_header_branch
      %18 = sbr.rel (%p16) target = $region8
    $region5: #{tpu_custom_call.1} parent=1 // loop_body
      %s20 = ssub.s32 %s15, 1
      %s21 = ssub.s32 %s15, 2
      %s28 = sadd.s32 1, %s23
      %p29 = scmp.ge.s32.totalorder %s28, 1
      %s30 = scalar_select %p29, 0, %s28
      %s31 = sadd.s32 1, %s22
      %s32 = scalar_select %p29, %s31, %s22
      %p33 = scmp.ge.s32.totalorder %s32, 2
      %s34 = scalar_select %p33, 0, %s32
      %s35 = sadd.s32 %s22, %s23
      %s36 = sadd.s32 %s34, %s30
      %s37 = ssub.s32 %s35, %s36
      %p38 = scmp.eq.s32.totalorder %s37, 0
      %s40 = sadd.s32 %s39, 1
      %s41 = scalar_select %p38, %s39, %s40
      %p44 = pneg %p38
      %p45 = scmp.eq.s32.totalorder %s15, 1
      %p46 = por %p44, %p45
      %p47 = scmp.ne.s32.totalorder %s39, %s42
      %p48 = scmp.eq.s32.totalorder %s15, 0
      %p49 = por %p47, %p48
      %p50 = scmp.ne.s32.totalorder %s39, %s42
      %p51 = scmp.eq.s32.totalorder %s20, 1
      %p52 = por %p50, %p51
      %p53 = scmp.ne.s32.totalorder %s42, %s43
      %p54 = scmp.eq.s32.totalorder %s20, 0
      %p55 = por %p53, %p54
      %p56 = scmp.ne.s32.totalorder %s42, %s43
      %p57 = scmp.eq.s32.totalorder %s21, 1
      %p58 = por %p56, %p57
      %p60 = scmp.ne.s32.totalorder %s43, %s59
      %p61 = scmp.eq.s32.totalorder %s21, 0
      %p62 = por %p60, %p61
      %s64 = sadd.s32 %s63, 1
      %p67 = scmp.eq.s32.totalorder %s15, 1
      %p68 = scmp.ne.s32.totalorder %s63, %s65
      %p69 = scmp.eq.s32.totalorder %s15, 0
      %p70 = por %p68, %p69
      %p71 = scmp.ne.s32.totalorder %s63, %s65
      %p72 = scmp.eq.s32.totalorder %s20, 1
      %p73 = por %p71, %p72
      %p74 = scmp.ne.s32.totalorder %s65, %s66
      %p75 = scmp.eq.s32.totalorder %s20, 0
      %p76 = por %p74, %p75
      %p77 = scmp.ne.s32.totalorder %s65, %s66
      %p78 = scmp.eq.s32.totalorder %s21, 1
      %p79 = por %p77, %p78
      %p81 = scmp.ne.s32.totalorder %s66, %s80
      %p82 = scmp.eq.s32.totalorder %s21, 0
      %p83 = por %p81, %p82
      %s85 = sadd.s32 %s84, 1
      %p88 = scmp.eq.s32.totalorder %s15, 1
      %p89 = scmp.ne.s32.totalorder %s84, %s86
      %p90 = scmp.eq.s32.totalorder %s15, 0
      %p91 = por %p89, %p90
      %p92 = scmp.ne.s32.totalorder %s84, %s86
      %p93 = scmp.eq.s32.totalorder %s20, 1
      %p94 = por %p92, %p93
      %p95 = scmp.ne.s32.totalorder %s86, %s87
      %p96 = scmp.eq.s32.totalorder %s20, 0
      %p97 = por %p95, %p96
      %p98 = scmp.ne.s32.totalorder %s86, %s87
      %p99 = scmp.eq.s32.totalorder %s21, 1
      %p100 = por %p98, %p99
      %p102 = scmp.ne.s32.totalorder %s87, %s101
      %p103 = scmp.eq.s32.totalorder %s21, 0
      %p104 = por %p102, %p103
      %s106 = sadd.s32 %s105, 1
      %p109 = scmp.eq.s32.totalorder %s15, 1
      %p110 = scmp.ne.s32.totalorder %s105, %s107
      %p111 = scmp.eq.s32.totalorder %s15, 0
      %p112 = por %p110, %p111
      %p113 = scmp.ne.s32.totalorder %s105, %s107
      %p114 = scmp.eq.s32.totalorder %s20, 1
      %p115 = por %p113, %p114
      %p116 = scmp.ne.s32.totalorder %s107, %s108
      %p117 = scmp.eq.s32.totalorder %s20, 0
      %p118 = por %p116, %p117
      %p119 = scmp.ne.s32.totalorder %s107, %s108
      %p120 = scmp.eq.s32.totalorder %s21, 1
      %p121 = por %p119, %p120
      %p123 = scmp.ne.s32.totalorder %s108, %s122
      %p124 = scmp.eq.s32.totalorder %s21, 0
      %p125 = por %p123, %p124
      %s127 = sadd.s32 %s126, 1
      %p130 = scmp.eq.s32.totalorder %s15, 1
      %p131 = scmp.ne.s32.totalorder %s126, %s128
      %p132 = scmp.eq.s32.totalorder %s15, 0
      %p133 = por %p131, %p132
      %p134 = scmp.ne.s32.totalorder %s126, %s128
      %p135 = scmp.eq.s32.totalorder %s20, 1
      %p136 = por %p134, %p135
      %p137 = scmp.ne.s32.totalorder %s128, %s129
      %p138 = scmp.eq.s32.totalorder %s20, 0
      %p139 = por %p137, %p138
      %p140 = scmp.ne.s32.totalorder %s128, %s129
      %p141 = scmp.eq.s32.totalorder %s21, 1
      %p142 = por %p140, %p141
      %p144 = scmp.ne.s32.totalorder %s129, %s143
      %p145 = scmp.eq.s32.totalorder %s21, 0
      %p146 = por %p144, %p145
      %s147 = ssub.s32 %s22, %s34
      %p148 = scmp.eq.s32.totalorder %s147, 0
      %s150 = sadd.s32 %s149, 1
      %s151 = scalar_select %p148, %s149, %s150
      %p154 = pneg %p148
      %p155 = scmp.eq.s32.totalorder %s15, 1
      %p156 = por %p154, %p155
      %p157 = scmp.ne.s32.totalorder %s149, %s152
      %p158 = scmp.eq.s32.totalorder %s15, 0
      %p159 = por %p157, %p158
      %p160 = scmp.ne.s32.totalorder %s149, %s152
      %p161 = scmp.eq.s32.totalorder %s20, 1
      %p162 = por %p160, %p161
      %p163 = scmp.ne.s32.totalorder %s152, %s153
      %p164 = scmp.eq.s32.totalorder %s20, 0
      %p165 = por %p163, %p164
      %p166 = scmp.ne.s32.totalorder %s152, %s153
      %p167 = scmp.eq.s32.totalorder %s21, 1
      %p168 = por %p166, %p167
      %p170 = scmp.ne.s32.totalorder %s153, %s169
      %p171 = scmp.eq.s32.totalorder %s21, 0
      %p172 = por %p170, %p171
      %p173 = scmp.le.s32.totalorder 1, %s15
      %p174 = scmp.lt.s32.totalorder %s15, 3
      %p175 = pnand %p173, %p174
      %p176 = pneg %p175
      // Predicated region
      $region9: #{tpu_custom_call.1} parent=5 // pred_check
        _
      $region10: #{tpu_custom_call.1} parent=5 // pred_check_branch
        %178 = sbr.rel (%p175) target = $region12
      $region11: #{tpu_custom_call.1} parent=5 // pred_region
        %s179 = ssub.s32 %s15, 1
        // Predicated region
        $region13: #{tpu_custom_call.1} parent=11 // pred_check
          %p180 = pneg %p76
        $region14: #{tpu_custom_call.1} parent=11 // pred_check_branch
          %182 = sbr.rel (%p180) target = $region16
        $region15: #{tpu_custom_call.1} parent=11 // pred_region
          %184 = vsyncadd [#allocation6], 0
          %s185 = sshll.u32 %s1, 4
          %s186 = int_to_ptr.hbm [resolvable:$true] %s185
          %s187 = sshll.u32 [#allocation5], 4
          %s188 = int_to_ptr.vmem [resolvable:$true] %s187
          %193 = dma.hbm_to_vmem [thread:$0]  %s186, 1024, %s188, [#allocation6], 64, 64, 4
        $region16: #{tpu_custom_call.1} parent=11 // pred_fallthru
          _
        // Predicated region
        $region17: #{tpu_custom_call.1} parent=11 // pred_check
          %p194 = pneg %p97
        $region18: #{tpu_custom_call.1} parent=11 // pred_check_branch
          %196 = sbr.rel (%p194) target = $region20
        $region19: #{tpu_custom_call.1} parent=11 // pred_region
          _
        $region20: #{tpu_custom_call.1} parent=11 // pred_fallthru
          _
        // Predicated region
        $region21: #{tpu_custom_call.1} parent=11 // pred_check
          %p197 = pneg %p118
        $region22: #{tpu_custom_call.1} parent=11 // pred_check_branch
          %199 = sbr.rel (%p197) target = $region24
        $region23: #{tpu_custom_call.1} parent=11 // pred_region
          %201 = vsyncadd [#allocation6], 0
          %s202 = sshll.u32 %s3, 4
          %s203 = int_to_ptr.hbm [resolvable:$true] %s202
          %s204 = sshll.u32 [#allocation7], 4
          %s205 = int_to_ptr.vmem [resolvable:$true] %s204
          %210 = dma.hbm_to_vmem [thread:$0]  %s203, 1024, %s205, [#allocation6], 64, 64, 4
        $region24: #{tpu_custom_call.1} parent=11 // pred_fallthru
          _
        // Predicated region
        $region25: #{tpu_custom_call.1} parent=11 // pred_check
          %p211 = pneg %p139
        $region26: #{tpu_custom_call.1} parent=11 // pred_check_branch
          %213 = sbr.rel (%p211) target = $region28
        $region27: #{tpu_custom_call.1} parent=11 // pred_region
          _
        $region28: #{tpu_custom_call.1} parent=11 // pred_fallthru
          _
      $region12: #{tpu_custom_call.1} parent=5 // pred_fallthru
        _
      %p214 = scmp.lt.s32.totalorder %s15, 2
      // Predicated region
      $region29: #{tpu_custom_call.1} parent=5 // pred_check
        %p215 = pneg %p214
      $region30: #{tpu_custom_call.1} parent=5 // pred_check_branch
        %217 = sbr.rel (%p215) target = $region32
      $region31: #{tpu_custom_call.1} parent=5 // pred_region
        // Predicated region
        $region33: #{tpu_custom_call.1} parent=31 // pred_check
          %p218 = pneg %p49
        $region34: #{tpu_custom_call.1} parent=31 // pred_check_branch
          %220 = sbr.rel (%p218) target = $region36
        $region35: #{tpu_custom_call.1} parent=31 // pred_region
          %s221 = sand.u32 %s39, 1
          %s222 = scalar_lea.sflag [#allocation4], %s221
          %s223 = sand.u32 %s39, 1
          %s224 = smul.addr %s223, 128
          %s225 = scalar_lea.vmem [#allocation3], %s224
          %s226 = sadd.s32 %s22, %s23
          %s227 = smul.u32 32, %s226
          %229 = vsyncadd %s222, 0
          %s230 = smul.addr %s227, 4
          %s231 = scalar_lea.hbm %s0, %s230
          %s232 = sshll.u32 %s231, 4
          %s233 = int_to_ptr.hbm [resolvable:$true] %s232
          %s234 = sshll.u32 %s225, 4
          %s235 = int_to_ptr.vmem [resolvable:$true] %s234
          %240 = dma.hbm_to_vmem [thread:$0]  %s233, 2048, %s235, %s222, 64, 64, 4
        $region36: #{tpu_custom_call.1} parent=31 // pred_fallthru
          _
      $region32: #{tpu_custom_call.1} parent=5 // pred_fallthru
        _
      %p241 = scmp.le.s32.totalorder 1, %s15
      %p242 = scmp.lt.s32.totalorder %s15, 3
      %p243 = pnand %p241, %p242
      %p244 = pneg %p243
      // Predicated region
      $region37: #{tpu_custom_call.1} parent=5 // pred_check
        _
      $region38: #{tpu_custom_call.1} parent=5 // pred_check_branch
        %246 = sbr.rel (%p243) target = $region40
      $region39: #{tpu_custom_call.1} parent=5 // pred_region
        %s247 = ssub.s32 %s15, 1
        %s248 = sand.u32 %s42, 1
        %s249 = scalar_lea.sflag [#allocation4], %s248
        %s250 = sand.u32 %s42, 1
        %s251 = smul.addr %s250, 128
        %s252 = scalar_lea.vmem [#allocation3], %s251
        // Predicated region
        $region41: #{tpu_custom_call.1} parent=39 // pred_check
          %p253 = pneg %p55
        $region42: #{tpu_custom_call.1} parent=39 // pred_check_branch
          %255 = sbr.rel (%p253) target = $region44
        $region43: #{tpu_custom_call.1} parent=39 // pred_region
          %257 = dma.done %s249, 2048
        $region44: #{tpu_custom_call.1} parent=39 // pred_fallthru
          _
        // Predicated region
        $region45: #{tpu_custom_call.1} parent=39 // pred_check
          %p258 = pneg %p76
        $region46: #{tpu_custom_call.1} parent=39 // pred_check_branch
          %260 = sbr.rel (%p258) target = $region48
        $region47: #{tpu_custom_call.1} parent=39 // pred_region
          %262 = dma.done [#allocation6], 1024
        $region48: #{tpu_custom_call.1} parent=39 // pred_fallthru
          _
        // Predicated region
        $region49: #{tpu_custom_call.1} parent=39 // pred_check
          %p263 = pneg %p118
        $region50: #{tpu_custom_call.1} parent=39 // pred_check_branch
          %265 = sbr.rel (%p263) target = $region52
        $region51: #{tpu_custom_call.1} parent=39 // pred_region
          %267 = dma.done [#allocation6], 1024
        $region52: #{tpu_custom_call.1} parent=39 // pred_fallthru
          _
        %s268 = sand.u32 %s42, 1
        %s269 = scalar_lea.sflag [#allocation4], %s268
        %s270 = sand.u32 %s42, 1
        %s271 = smul.addr %s270, 128
        %s272 = scalar_lea.vmem [#allocation3], %s271
        %p273 = pneg %p55
        %p274 = pneg %p52
        %p275 = pneg %p76
        %p276 = pneg %p73
        %p277 = pneg %p97
        %p278 = pneg %p94
        %p279 = pneg %p118
        %p280 = pneg %p115
        %p281 = pneg %p139
        %p282 = pneg %p136
        %p283 = pneg %p165
        %p284 = pneg %p162
        %p285 = scmp.lt.s32.totalorder %s24, 1
        %s286 = scalar_select %p285, %s24, 1
        %s287 = scalar_lea.vmem %s5, %s286
        %s288 = sadd.s32 %s24, %s25
        %s289 = smul.u32 32, %s288
        %p290 = scmp.lt.s32.totalorder %s24, 1
        %s291 = scalar_select %p290, %s24, 1
        %s292 = scalar_lea.vmem %s5, %s291
        %p293 = scmp.eq.s32.totalorder %s25, 0
        // Predicated region
        $region53: #{tpu_custom_call.1} parent=39 // pred_check
          %p294 = pneg %p293
        $region54: #{tpu_custom_call.1} parent=39 // pred_check_branch
          %296 = sbr.rel (%p294) target = $region56
        $region55: #{tpu_custom_call.1} parent=39 // pred_region
          %297 = vst [vmem:[#allocation2] sm:$0x1] 0.0
        $region56: #{tpu_custom_call.1} parent=39 // pred_fallthru
          _
        %v298 = vld [vmem:[%s252] sm:$0xf]
        %v299 = vld [vmem:[%s252 + $0x4] sm:$0xf]
        %v300 = vld [vmem:[%s252 + $0x8] sm:$0xf]
        %v301 = vld [vmem:[%s252 + $0xc] sm:$0xf]
        %v302 = vld [vmem:[%s252 + $0x10] sm:$0xf]
        %v303 = vld [vmem:[%s252 + $0x14] sm:$0xf]
        %v304 = vld [vmem:[%s252 + $0x18] sm:$0xf]
        %v305 = vld [vmem:[%s252 + $0x1c] sm:$0xf]
        %v306 = vld [vmem:[%s252 + $0x20] sm:$0xf]
        %v307 = vld [vmem:[%s252 + $0x24] sm:$0xf]
        %v308 = vld [vmem:[%s252 + $0x28] sm:$0xf]
        %v309 = vld [vmem:[%s252 + $0x2c] sm:$0xf]
        %v310 = vld [vmem:[%s252 + $0x30] sm:$0xf]
        %v311 = vld [vmem:[%s252 + $0x34] sm:$0xf]
        %v312 = vld [vmem:[%s252 + $0x38] sm:$0xf]
        %v313 = vld [vmem:[%s252 + $0x3c] sm:$0xf]
        %v314 = vld [vmem:[%s252 + $0x40] sm:$0xf]
        %v315 = vld [vmem:[%s252 + $0x44] sm:$0xf]
        %v316 = vld [vmem:[%s252 + $0x48] sm:$0xf]
        %v317 = vld [vmem:[%s252 + $0x4c] sm:$0xf]
        %v318 = vld [vmem:[%s252 + $0x50] sm:$0xf]
        %v319 = vld [vmem:[%s252 + $0x54] sm:$0xf]
        %v320 = vld [vmem:[%s252 + $0x58] sm:$0xf]
        %v321 = vld [vmem:[%s252 + $0x5c] sm:$0xf]
        %v322 = vld [vmem:[%s252 + $0x60] sm:$0xf]
        %v323 = vld [vmem:[%s252 + $0x64] sm:$0xf]
        %v324 = vld [vmem:[%s252 + $0x68] sm:$0xf]
        %v325 = vld [vmem:[%s252 + $0x6c] sm:$0xf]
        %v326 = vld [vmem:[%s252 + $0x70] sm:$0xf]
        %v327 = vld [vmem:[%s252 + $0x74] sm:$0xf]
        %v328 = vld [vmem:[%s252 + $0x78] sm:$0xf]
        %v329 = vld [vmem:[%s252 + $0x7c] sm:$0xf]
        %v330 = vld [vmem:[#allocation5] sm:$0xf]
        %v331 = vld [vmem:[#allocation5 + $0x4] sm:$0xf]
        %v332 = vld [vmem:[#allocation5 + $0x8] sm:$0xf]
        %v333 = vld [vmem:[#allocation5 + $0xc] sm:$0xf]
        %v334 = vld [vmem:[#allocation5 + $0x10] sm:$0xf]
        %v335 = vld [vmem:[#allocation5 + $0x14] sm:$0xf]
        %v336 = vld [vmem:[#allocation5 + $0x18] sm:$0xf]
        %v337 = vld [vmem:[#allocation5 + $0x1c] sm:$0xf]
        %v338 = vld [vmem:[#allocation5 + $0x20] sm:$0xf]
        %v339 = vld [vmem:[#allocation5 + $0x24] sm:$0xf]
        %v340 = vld [vmem:[#allocation5 + $0x28] sm:$0xf]
        %v341 = vld [vmem:[#allocation5 + $0x2c] sm:$0xf]
        %v342 = vld [vmem:[#allocation5 + $0x30] sm:$0xf]
        %v343 = vld [vmem:[#allocation5 + $0x34] sm:$0xf]
        %v344 = vld [vmem:[#allocation5 + $0x38] sm:$0xf]
        %v345 = vld [vmem:[#allocation5 + $0x3c] sm:$0xf]
        %v346 = vld [vmem:[%s2] sm:$0x1]
        %v348 = vperm.slane %v346, 0
        %v382 = vunpack.c.l.b16 %v298
        %v383 = vunpack.c.l.b16 %v299
        %v384 = vunpack.c.l.b16 %v300
        %v385 = vunpack.c.l.b16 %v301
        %v386 = vunpack.c.l.b16 %v302
        %v387 = vunpack.c.l.b16 %v303
        %v388 = vunpack.c.l.b16 %v304
        %v389 = vunpack.c.l.b16 %v305
        %v390 = vunpack.c.l.b16 %v306
        %v391 = vunpack.c.l.b16 %v307
        %v392 = vunpack.c.l.b16 %v308
        %v393 = vunpack.c.l.b16 %v309
        %v394 = vunpack.c.l.b16 %v310
        %v395 = vunpack.c.l.b16 %v311
        %v396 = vunpack.c.l.b16 %v312
        %v397 = vunpack.c.l.b16 %v313
        %v398 = vunpack.c.l.b16 %v314
        %v399 = vunpack.c.l.b16 %v315
        %v400 = vunpack.c.l.b16 %v316
        %v401 = vunpack.c.l.b16 %v317
        %v402 = vunpack.c.l.b16 %v318
        %v403 = vunpack.c.l.b16 %v319
        %v404 = vunpack.c.l.b16 %v320
        %v405 = vunpack.c.l.b16 %v321
        %v406 = vunpack.c.l.b16 %v322
        %v407 = vunpack.c.l.b16 %v323
        %v408 = vunpack.c.l.b16 %v324
        %v409 = vunpack.c.l.b16 %v325
        %v410 = vunpack.c.l.b16 %v326
        %v411 = vunpack.c.l.b16 %v327
        %v412 = vunpack.c.l.b16 %v328
        %v413 = vunpack.c.l.b16 %v329
        %v414 = vpack.c.b16 %v383, %v382
        %v415 = vpack.c.b16 %v385, %v384
        %v416 = vpack.c.b16 %v387, %v386
        %v417 = vpack.c.b16 %v389, %v388
        %v418 = vpack.c.b16 %v391, %v390
        %v419 = vpack.c.b16 %v393, %v392
        %v420 = vpack.c.b16 %v395, %v394
        %v421 = vpack.c.b16 %v397, %v396
        %v422 = vpack.c.b16 %v399, %v398
        %v423 = vpack.c.b16 %v401, %v400
        %v424 = vpack.c.b16 %v403, %v402
        %v425 = vpack.c.b16 %v405, %v404
        %v426 = vpack.c.b16 %v407, %v406
        %v427 = vpack.c.b16 %v409, %v408
        %v428 = vpack.c.b16 %v411, %v410
        %v429 = vpack.c.b16 %v413, %v412
        %v462 = vunpack.c.l.b16 %v330
        %v463 = vunpack.c.l.b16 %v331
        %v464 = vunpack.c.l.b16 %v332
        %v465 = vunpack.c.l.b16 %v333
        %v466 = vunpack.c.l.b16 %v334
        %v467 = vunpack.c.l.b16 %v335
        %v468 = vunpack.c.l.b16 %v336
        %v469 = vunpack.c.l.b16 %v337
        %v470 = vunpack.c.l.b16 %v338
        %v471 = vunpack.c.l.b16 %v339
        %v472 = vunpack.c.l.b16 %v340
        %v473 = vunpack.c.l.b16 %v341
        %v474 = vunpack.c.l.b16 %v342
        %v475 = vunpack.c.l.b16 %v343
        %v476 = vunpack.c.l.b16 %v344
        %v477 = vunpack.c.l.b16 %v345
        %v478 = vpack.c.b16 %v463, %v462
        %v479 = vpack.c.b16 %v465, %v464
        %v480 = vpack.c.b16 %v467, %v466
        %v481 = vpack.c.b16 %v469, %v468
        %v482 = vpack.c.b16 %v471, %v470
        %v483 = vpack.c.b16 %v473, %v472
        %v484 = vpack.c.b16 %v475, %v474
        %v485 = vpack.c.b16 %v477, %v476
        %494 = vmatpush.bf16.msra.mxu0 %v485
        %495 = vmatpush.bf16.msra.mxu0 %v484
        %496 = vmatpush.bf16.msra.mxu0 %v483
        %497 = vmatpush.bf16.msra.mxu0 %v482
        %498 = vmatpush.bf16.msra.mxu0 %v481
        %499 = vmatpush.bf16.msra.mxu0 %v480
        %500 = vmatpush.bf16.msra.mxu0 %v479
        %501 = vmatpush.bf16.msra.mxu0 %v478
        %502 = vmatmul.bf16.gmra.mxu0 %v414
        %v503 = vpop.f32.mrf.mxu0
        %v504 = vadd.f32 %v348, %v503
        %v505 = vpop.f32.mrf.mxu0
        %v506 = vadd.f32 %v348, %v505
        %507 = vmatmul.bf16.gmra.mxu0 %v415
        %v508 = vpop.f32.mrf.mxu0
        %v509 = vadd.f32 %v348, %v508
        %v510 = vpop.f32.mrf.mxu0
        %v511 = vadd.f32 %v348, %v510
        %512 = vmatmul.bf16.gmra.mxu0 %v416
        %v513 = vpop.f32.mrf.mxu0
        %v514 = vadd.f32 %v348, %v513
        %v515 = vpop.f32.mrf.mxu0
        %v516 = vadd.f32 %v348, %v515
        %517 = vmatmul.bf16.gmra.mxu0 %v417
        %v518 = vpop.f32.mrf.mxu0
        %v519 = vadd.f32 %v348, %v518
        %v520 = vpop.f32.mrf.mxu0
        %v521 = vadd.f32 %v348, %v520
        %522 = vmatmul.bf16.gmra.mxu0 %v418
        %v523 = vpop.f32.mrf.mxu0
        %v524 = vadd.f32 %v348, %v523
        %v525 = vpop.f32.mrf.mxu0
        %v526 = vadd.f32 %v348, %v525
        %527 = vmatmul.bf16.gmra.mxu0 %v419
        %v528 = vpop.f32.mrf.mxu0
        %v529 = vadd.f32 %v348, %v528
        %v530 = vpop.f32.mrf.mxu0
        %v531 = vadd.f32 %v348, %v530
        %532 = vmatmul.bf16.gmra.mxu0 %v420
        %v533 = vpop.f32.mrf.mxu0
        %v534 = vadd.f32 %v348, %v533
        %v535 = vpop.f32.mrf.mxu0
        %v536 = vadd.f32 %v348, %v535
        %537 = vmatmul.bf16.gmra.mxu0 %v421
        %v538 = vpop.f32.mrf.mxu0
        %v539 = vadd.f32 %v348, %v538
        %v540 = vpop.f32.mrf.mxu0
        %v541 = vadd.f32 %v348, %v540
        %542 = vmatmul.bf16.gmra.mxu0 %v422
        %v543 = vpop.f32.mrf.mxu0
        %v544 = vadd.f32 %v348, %v543
        %v545 = vpop.f32.mrf.mxu0
        %v546 = vadd.f32 %v348, %v545
        %547 = vmatmul.bf16.gmra.mxu0 %v423
        %v548 = vpop.f32.mrf.mxu0
        %v549 = vadd.f32 %v348, %v548
        %v550 = vpop.f32.mrf.mxu0
        %v551 = vadd.f32 %v348, %v550
        %552 = vmatmul.bf16.gmra.mxu0 %v424
        %v553 = vpop.f32.mrf.mxu0
        %v554 = vadd.f32 %v348, %v553
        %v555 = vpop.f32.mrf.mxu0
        %v556 = vadd.f32 %v348, %v555
        %557 = vmatmul.bf16.gmra.mxu0 %v425
        %v558 = vpop.f32.mrf.mxu0
        %v559 = vadd.f32 %v348, %v558
        %v560 = vpop.f32.mrf.mxu0
        %v561 = vadd.f32 %v348, %v560
        %562 = vmatmul.bf16.gmra.mxu0 %v426
        %v563 = vpop.f32.mrf.mxu0
        %v564 = vadd.f32 %v348, %v563
        %v565 = vpop.f32.mrf.mxu0
        %v566 = vadd.f32 %v348, %v565
        %567 = vmatmul.bf16.gmra.mxu0 %v427
        %v568 = vpop.f32.mrf.mxu0
        %v569 = vadd.f32 %v348, %v568
        %v570 = vpop.f32.mrf.mxu0
        %v571 = vadd.f32 %v348, %v570
        %572 = vmatmul.bf16.gmra.mxu0 %v428
        %v573 = vpop.f32.mrf.mxu0
        %v574 = vadd.f32 %v348, %v573
        %v575 = vpop.f32.mrf.mxu0
        %v576 = vadd.f32 %v348, %v575
        %577 = vmatmul.bf16.gmra.mxu0 %v429
        %v578 = vpop.f32.mrf.mxu0
        %v579 = vadd.f32 %v348, %v578
        %v580 = vpop.f32.mrf.mxu0
        %v581 = vadd.f32 %v348, %v580
        %582 = vdwg.mxu0
        %v583 = vmax.f32 %v504, 0.0
        %v584 = vmax.f32 %v506, 0.0
        %v585 = vmax.f32 %v509, 0.0
        %v586 = vmax.f32 %v511, 0.0
        %v587 = vmax.f32 %v514, 0.0
        %v588 = vmax.f32 %v516, 0.0
        %v589 = vmax.f32 %v519, 0.0
        %v590 = vmax.f32 %v521, 0.0
        %v591 = vmax.f32 %v524, 0.0
        %v592 = vmax.f32 %v526, 0.0
        %v593 = vmax.f32 %v529, 0.0
        %v594 = vmax.f32 %v531, 0.0
        %v595 = vmax.f32 %v534, 0.0
        %v596 = vmax.f32 %v536, 0.0
        %v597 = vmax.f32 %v539, 0.0
        %v598 = vmax.f32 %v541, 0.0
        %v599 = vmax.f32 %v544, 0.0
        %v600 = vmax.f32 %v546, 0.0
        %v601 = vmax.f32 %v549, 0.0
        %v602 = vmax.f32 %v551, 0.0
        %v603 = vmax.f32 %v554, 0.0
        %v604 = vmax.f32 %v556, 0.0
        %v605 = vmax.f32 %v559, 0.0
        %v606 = vmax.f32 %v561, 0.0
        %v607 = vmax.f32 %v564, 0.0
        %v608 = vmax.f32 %v566, 0.0
        %v609 = vmax.f32 %v569, 0.0
        %v610 = vmax.f32 %v571, 0.0
        %v611 = vmax.f32 %v574, 0.0
        %v612 = vmax.f32 %v576, 0.0
        %v613 = vmax.f32 %v579, 0.0
        %v614 = vmax.f32 %v581, 0.0
        %v615 = vld [vmem:[#allocation2] sm:$0x1]
        %v616 = vadd.f32 %v583, %v584
        %v617 = vadd.f32 %v616, %v585
        %v618 = vadd.f32 %v617, %v586
        %v619 = vadd.f32 %v618, %v587
        %v620 = vadd.f32 %v619, %v588
        %v621 = vadd.f32 %v620, %v589
        %v622 = vadd.f32 %v621, %v590
        %v623 = vadd.f32 %v622, %v591
        %v624 = vadd.f32 %v623, %v592
        %v625 = vadd.f32 %v624, %v593
        %v626 = vadd.f32 %v625, %v594
        %v627 = vadd.f32 %v626, %v595
        %v628 = vadd.f32 %v627, %v596
        %v629 = vadd.f32 %v628, %v597
        %v630 = vadd.f32 %v629, %v598
        %v631 = vadd.f32 %v630, %v599
        %v632 = vadd.f32 %v631, %v600
        %v633 = vadd.f32 %v632, %v601
        %v634 = vadd.f32 %v633, %v602
        %v635 = vadd.f32 %v634, %v603
        %v636 = vadd.f32 %v635, %v604
        %v637 = vadd.f32 %v636, %v605
        %v638 = vadd.f32 %v637, %v606
        %v639 = vadd.f32 %v638, %v607
        %v640 = vadd.f32 %v639, %v608
        %v641 = vadd.f32 %v640, %v609
        %v642 = vadd.f32 %v641, %v610
        %v643 = vadd.f32 %v642, %v611
        %v644 = vadd.f32 %v643, %v612
        %v645 = vadd.f32 %v644, %v613
        %v646 = vadd.f32 %v645, %v614
        %v647 = vrot.slane %v646, 4
        %v648 = vadd.f32 %v646, %v647
        %v649 = vrot.slane %v648, 2
        %v650 = vadd.f32 %v648, %v649
        %v651 = vrot.slane %v650, 1
        %v652 = vadd.f32 %v650, %v651
        %v653 = vadd.f32 %v615, %v652
        %654 = vst [vmem:[#allocation2] sm:$0x1] %v653
        // Predicated region
        $region57: #{tpu_custom_call.1} parent=39 // pred_check
          %p655 = pneg %p293
        $region58: #{tpu_custom_call.1} parent=39 // pred_check_branch
          %657 = sbr.rel (%p655) target = $region60
        $region59: #{tpu_custom_call.1} parent=39 // pred_region
          %v658 = vld [vmem:[#allocation2] sm:$0x1]
          %v659 = vmul.f32 %v658, 0.00390625
          %v660 = vpack.c.bf16 %v659, %v659
          %v661 = vld [vmem:[#allocation7] sm:$0xf]
          %v662 = vld [vmem:[#allocation7 + $0x4] sm:$0xf]
          %v663 = vld [vmem:[#allocation7 + $0x8] sm:$0xf]
          %v664 = vld [vmem:[#allocation7 + $0xc] sm:$0xf]
          %v665 = vld [vmem:[#allocation7 + $0x10] sm:$0xf]
          %v666 = vld [vmem:[#allocation7 + $0x14] sm:$0xf]
          %v667 = vld [vmem:[#allocation7 + $0x18] sm:$0xf]
          %v668 = vld [vmem:[#allocation7 + $0x1c] sm:$0xf]
          %v669 = vld [vmem:[#allocation7 + $0x20] sm:$0xf]
          %v670 = vld [vmem:[#allocation7 + $0x24] sm:$0xf]
          %v671 = vld [vmem:[#allocation7 + $0x28] sm:$0xf]
          %v672 = vld [vmem:[#allocation7 + $0x2c] sm:$0xf]
          %v673 = vld [vmem:[#allocation7 + $0x30] sm:$0xf]
          %v674 = vld [vmem:[#allocation7 + $0x34] sm:$0xf]
          %v675 = vld [vmem:[#allocation7 + $0x38] sm:$0xf]
          %v676 = vld [vmem:[#allocation7 + $0x3c] sm:$0xf]
          %v677 = vld [vmem:[%s4] sm:$0x1]
          %v694 = vunpack.c.l.b16 %v661
          %v695 = vunpack.c.l.b16 %v662
          %v696 = vunpack.c.l.b16 %v663
          %v697 = vunpack.c.l.b16 %v664
          %v698 = vunpack.c.l.b16 %v665
          %v699 = vunpack.c.l.b16 %v666
          %v700 = vunpack.c.l.b16 %v667
          %v701 = vunpack.c.l.b16 %v668
          %v702 = vunpack.c.l.b16 %v669
          %v703 = vunpack.c.l.b16 %v670
          %v704 = vunpack.c.l.b16 %v671
          %v705 = vunpack.c.l.b16 %v672
          %v706 = vunpack.c.l.b16 %v673
          %v707 = vunpack.c.l.b16 %v674
          %v708 = vunpack.c.l.b16 %v675
          %v709 = vunpack.c.l.b16 %v676
          %v710 = vpack.c.b16 %v695, %v694
          %v711 = vpack.c.b16 %v697, %v696
          %v712 = vpack.c.b16 %v699, %v698
          %v713 = vpack.c.b16 %v701, %v700
          %v714 = vpack.c.b16 %v703, %v702
          %v715 = vpack.c.b16 %v705, %v704
          %v716 = vpack.c.b16 %v707, %v706
          %v717 = vpack.c.b16 %v709, %v708
          %726 = vmatpush.bf16.msra.mxu0 %v717
          %727 = vmatpush.bf16.msra.mxu0 %v716
          %728 = vmatpush.bf16.msra.mxu0 %v715
          %729 = vmatpush.bf16.msra.mxu0 %v714
          %730 = vmatpush.bf16.msra.mxu0 %v713
          %731 = vmatpush.bf16.msra.mxu0 %v712
          %732 = vmatpush.bf16.msra.mxu0 %v711
          %733 = vmatpush.bf16.msra.mxu0 %v710
          %734 = vmatmul.bf16.gmra.mxu0 %v660
          %v735 = vpop.f32.mrf.mxu0
          %v736 = vadd.f32 %v677, %v735
          %v737 = vpop.f32.mrf.mxu0
          %738 = vdwg.mxu0
          %v739 = vpack.c.bf16 %v736, %v736
          %vm740 = vcmask 1040384
          %vm741 = vsmask.f32 256
          %vm742 = vmand %vm740, %vm741
          %v743 = vld [vmem:[%s292] sm:$0x1]
          %v744 = vsel %vm742, %v739, %v743
          %745 = vst [vmem:[%s292] sm:$0x1] %v744
        $region60: #{tpu_custom_call.1} parent=39 // pred_fallthru
          _
        %p746 = scmp.lt.s32.totalorder %s24, 1
        %s747 = scalar_select %p746, %s24, 1
        %s748 = scalar_lea.vmem %s5, %s747
        // Predicated region
        $region61: #{tpu_custom_call.1} parent=39 // pred_check
          %p749 = pneg %p162
        $region62: #{tpu_custom_call.1} parent=39 // pred_check_branch
          %751 = sbr.rel (%p749) target = $region64
        $region63: #{tpu_custom_call.1} parent=39 // pred_region
          _
        $region64: #{tpu_custom_call.1} parent=39 // pred_fallthru
          _
      $region40: #{tpu_custom_call.1} parent=5 // pred_fallthru
        _
      %p752 = scmp.le.s32.totalorder 2, %s15
      // Predicated region
      $region65: #{tpu_custom_call.1} parent=5 // pred_check
        %p753 = pneg %p752
      $region66: #{tpu_custom_call.1} parent=5 // pred_check_branch
        %755 = sbr.rel (%p753) target = $region68
      $region67: #{tpu_custom_call.1} parent=5 // pred_region
        %s756 = ssub.s32 %s15, 2
        // Predicated region
        $region69: #{tpu_custom_call.1} parent=67 // pred_check
          %p757 = pneg %p168
        $region70: #{tpu_custom_call.1} parent=67 // pred_check_branch
          %759 = sbr.rel (%p757) target = $region72
        $region71: #{tpu_custom_call.1} parent=67 // pred_region
          %p760 = scmp.lt.s32.totalorder %s26, 1
          %s761 = scalar_select %p760, %s26, 1
          %s762 = scalar_lea.vmem %s5, %s761
        $region72: #{tpu_custom_call.1} parent=67 // pred_fallthru
          _
      $region68: #{tpu_custom_call.1} parent=5 // pred_fallthru
        _
    $region6: #{tpu_custom_call.1} parent=1 // loop_footer
      %s19 = sadd.s32 1, %s15
    $region7: #{tpu_custom_call.1} parent=1 // loop_footer_branch
      %14 = sbr.rel target = $region3
    $region8: #{tpu_custom_call.1} parent=1 // loop_exit
      _
    %763 = vsyncpa [#allocation4], 1
    %s764 = scalar_lea.sflag [#allocation4], 1
    %765 = vsyncpa %s764, 1
    %766 = vsyncpa [#allocation6], 1

</llo_original>
